<compile_context>
chip_gen: v6e
topology: v6e:2x2x1
jax: 0.10.0
libtpu: 0.0.40
codegen_flags: <defaults>
</compile_context>

<pallas_src>
import numpy as np

import jax
import jax.numpy as jnp
from jax.experimental import pallas as pl
from jax.experimental.pallas import tpu as pltpu

# ----------------------------- synthetic config ------------------------------
B = 2            # batch
C_IN = 4         # waveform channels
L = 16           # waveform length
C_OUT = 8        # conv out channels
KSIZE = 3        # conv kernel size (padding=1 -> "same" length)
PAD = (KSIZE - 1) // 2
POOL = 2         # MaxPool1d(kernel_size=2)
L2 = L // POOL
WF_EMB = 32      # Linear after Flatten in waveform encoder
N_FEATS = 10     # total additional feats columns
FEATS_IDX = tuple(range(6))          # cfg.model.additional_feats_mlp.feats_idx
N_SEL = len(FEATS_IDX)
FEAT_EMB = 16    # additional feats MLP output
CLS_HID = 32     # classifier MLP hidden width
LABEL_SCHEMA = {"level_0": 5, "level_1": 3}   # classes per label level
N_CLASSES_TOTAL = sum(LABEL_SCHEMA.values())

LANE = 128       # vreg lane width: every packed weight block is LANE lanes wide
SUB = 8          # vreg sublane count: batch is padded to a multiple of this

# --- static invariants the fused kernel relies on ----------------------------
assert FEATS_IDX == tuple(range(N_SEL))   # contiguous prefix -> static slice
assert L % POOL == 0                      # pool pairs never straddle a channel
assert C_IN * L + 1 <= LANE               # waveform flatten + ones-carry lane
assert C_OUT * L == LANE                  # conv output spans exactly LANE lanes
assert N_SEL + 1 <= LANE                  # feats + ones-carry lane
assert WF_EMB + FEAT_EMB + 1 <= LANE      # branch outputs + ones-carry lane
assert CLS_HID + 1 <= LANE                # classifier outputs + ones-carry lane
assert N_CLASSES_TOTAL <= LANE            # merged head logits

# row offsets of the four weight blocks inside the packed blob (sublane axis);
# all offsets / extents are multiples of LANE (hence 8-sublane aligned).
W_CONV_OFF = 0                            # (LANE,     LANE) conv Toeplitz + bias row
W_BRANCH_OFF = W_CONV_OFF + LANE          # (2*LANE,   LANE) block-diag wf/feat + bias row
W_CLS_OFF = W_BRANCH_OFF + 2 * LANE       # (LANE,     LANE) classifier + bias row
W_HEAD_OFF = W_CLS_OFF + LANE             # (LANE,     LANE) merged heads + bias row
W_BLOB_ROWS = W_HEAD_OFF + LANE           # 640 rows total (640x128 f32 = 320 KB)

ONES_LANE_WF = C_IN * L                   # ones-carry lane inside xflat_ext (=64)
ONES_LANE_FT = N_SEL                      # ones-carry lane inside feats_ext  (=6)
ONES_LANE_ENC = WF_EMB + FEAT_EMB         # ones-carry lane after branch matmul (=48)
ONES_LANE_H = CLS_HID                     # ones-carry lane after classifier    (=32)


def _vmem():
    return pl.BlockSpec(memory_space=pltpu.MemorySpace.VMEM)


# ------------------------------ fused kernel ---------------------------------
def _fused_forward_kernel(xflat_ref, feats_ref, wblob_ref, out_ref):
    """Whole Conv1DModel forward in one kernel (4 MXU pushes, all biases folded).

    xflat_ref : (Bp, 128)  waveform channel-major flatten in lanes [0,64),
                           1.0 at lane 64 (conv-bias carry), zeros elsewhere
    feats_ref : (Bp, 128)  selected feats in lanes [0,6), 1.0 at lane 6
                           (branch-bias carry), zeros elsewhere
    wblob_ref : (640, 128) single packed weight blob (see prep_params)
    out_ref   : (Bp, 128)  lane-dense logits slab; cols [0,8) hold all levels
    """
    # Static, tile-aligned views into the single packed weight blob (one DMA).
    w_conv = wblob_ref[W_CONV_OFF:W_CONV_OFF + LANE, :]            # (128,128)
    w_branch = wblob_ref[W_BRANCH_OFF:W_BRANCH_OFF + 2 * LANE, :]  # (256,128)
    w_cls = wblob_ref[W_CLS_OFF:W_CLS_OFF + LANE, :]               # (128,128)
    w_head = wblob_ref[W_HEAD_OFF:W_HEAD_OFF + LANE, :]            # (128,128)

    # --- waveform encoder: Conv1d("same") as one MXU matmul (zero padding and
    #     the conv bias are folded into w_conv via the Toeplitz layout and the
    #     ones-carry lane), then ReLU.
    act = jnp.maximum(
        jnp.dot(xflat_ref[...], w_conv, preferred_element_type=jnp.float32),
        0.0)                                                       # (Bp, 128)

    # --- MaxPool1d(2): pairwise max of adjacent lanes. The left-rotate-by-1 is
    #     a single XLU rotation (pltpu.roll with positive shift LANE-1, i.e.
    #     shifted[:, i] == act[:, (i+1) % LANE]).  The wrapped lane (127) and
    #     every odd lane are multiplied by zero rows of w_branch, so only the
    #     valid even-lane pool pairs matter; pairs never straddle a channel
    #     boundary because L % POOL == 0 (statically asserted above).
    shifted = pltpu.roll(act, shift=C_OUT * L - 1, axis=1)
    pooled = jnp.maximum(act, shifted)                             # (Bp, 128)

    # --- merged encoder branches: [pooled | feats] @ block-diag(W_wf, W_ft).
    #     Output cols [0,32) = waveform embedding, [32,48) = feats embedding,
    #     col 48 = 1.0 (bias carry for the classifier); ReLU keeps the carry.
    branch_in = jnp.concatenate([pooled, feats_ref[...]], axis=1)  # (Bp, 256)
    enc = jnp.maximum(
        jnp.dot(branch_in, w_branch, preferred_element_type=jnp.float32),
        0.0)                                                       # (Bp, 128)

    # --- classifier MLP: single matmul (concat + bias folded), ReLU.
    h = jnp.maximum(
        jnp.dot(enc, w_cls, preferred_element_type=jnp.float32),
        0.0)                                                       # (Bp, 128)

    # --- merged per-level heads: lane-dense output slab (cols >= 8 are zero).
    out_ref[...] = jnp.dot(
        h, w_head, preferred_element_type=jnp.float32).astype(out_ref.dtype)


# --------------------------------- wrapper ------------------------------------
def forward(kp, waveform, feats):
    """waveform: (B, C_IN, L) NCW, feats: (B, N_FEATS). Returns dict of logits."""
    bn = waveform.shape[0]
    bp = max(SUB, ((bn + SUB - 1) // SUB) * SUB)     # sublane-aligned batch

    ones = jnp.ones((bn, 1), jnp.float32)
    xflat = jnp.concatenate(
        [waveform.reshape(bn, C_IN * L).astype(jnp.float32), ones,
         jnp.zeros((bn, LANE - C_IN * L - 1), jnp.float32)], axis=1)
    feats_sel = feats[:, :N_SEL].astype(jnp.float32)  # static contiguous slice
    fext = jnp.concatenate(
        [feats_sel, ones,
         jnp.zeros((bn, LANE - N_SEL - 1), jnp.float32)], axis=1)
    if bp != bn:                                      # pad batch to 8 sublanes
        xflat = jnp.pad(xflat, ((0, bp - bn), (0, 0)))
        fext = jnp.pad(fext, ((0, bp - bn), (0, 0)))

    # TODO(synk): for production batch sizes add a leading batch grid axis with
    #             compiler_params=pltpu.CompilerParams(dimension_semantics=
    #             ("parallel",)) so v7x shards rows across its two TensorCores;
    #             at B=2 a gridless single call is optimal.
    logits = pl.pallas_call(
        _fused_forward_kernel,
        out_shape=jax.ShapeDtypeStruct((bp, LANE), jnp.float32),
        in_specs=[_vmem()] * 3,
        out_specs=_vmem(),
    )(xflat, fext, kp["wblob"])

    out, off = {}, 0
    for lvl, n in LABEL_SCHEMA.items():               # slice the merged slab
        out[lvl] = logits[:bn, off:off + n]
        off += n
    return out


# --------------------------- parameters (raw + prep) ---------------------------
def init_raw_params(key):
    """PyTorch-semantics parameters (linear weights stored as (in, out))."""
    ks = jax.random.split(key, 12)
    s = 0.1
    flat_dim = C_OUT * L2
    p = {
        "conv_w": s * jax.random.normal(ks[0], (C_OUT, C_IN, KSIZE), jnp.float32),
        "conv_b": s * jax.random.normal(ks[1], (C_OUT,), jnp.float32),
        "wf_lin_w": s * jax.random.normal(ks[2], (flat_dim, WF_EMB), jnp.float32),
        "wf_lin_b": s * jax.random.normal(ks[3], (WF_EMB,), jnp.float32),
        "feat_w": s * jax.random.normal(ks[4], (N_SEL, FEAT_EMB), jnp.float32),
        "feat_b": s * jax.random.normal(ks[5], (FEAT_EMB,), jnp.float32),
        "cls_w": s * jax.random.normal(ks[6], (WF_EMB + FEAT_EMB, CLS_HID), jnp.float32),
        "cls_b": s * jax.random.normal(ks[7], (CLS_HID,), jnp.float32),
        "heads": {},
    }
    for i, (lvl, ncls) in enumerate(LABEL_SCHEMA.items()):
        p["heads"][lvl] = (
            s * jax.random.normal(ks[8 + 2 * i], (CLS_HID, ncls), jnp.float32),
            s * jax.random.normal(ks[9 + 2 * i], (ncls,), jnp.float32),
        )
    return p


def prep_params(raw):
    """One-time layout prep: fold conv padding / im2col, maxpool even-column
    selection, branch block-diag merge, classifier concat, head merge and ALL
    biases into a single tile-aligned (640, 128) weight blob."""
    conv_w = np.asarray(raw["conv_w"])                      # (C_OUT, C_IN, K)

    blob = np.zeros((W_BLOB_ROWS, LANE), np.float32)

    # ---- block 1: conv Toeplitz + bias row ------------------------------------
    # conv[b,c,l] = sum_{ci,k} w[c,ci,k] * x[b,ci,l+k-PAD]  ("same" padding folded)
    w1 = blob[W_CONV_OFF:W_CONV_OFF + LANE]
    for c in range(C_OUT):
        for ci in range(C_IN):
            for k in range(KSIZE):
                for l in range(L):
                    p = l + k - PAD
                    if 0 <= p < L:
                        w1[ci * L + p, c * L + l] = conv_w[c, ci, k]
    w1[ONES_LANE_WF, :C_OUT * L] = np.repeat(np.asarray(raw["conv_b"]), L)

    # ---- block 2: block-diagonal branch weight + bias row + ones-carry --------
    # rows [0,128): flatten-Linear weight expanded to the pre-pool length with
    # the MaxPool even-column selection folded in (odd rows stay zero).
    w2 = blob[W_BRANCH_OFF:W_BRANCH_OFF + 2 * LANE]
    wfw = np.asarray(raw["wf_lin_w"]).reshape(C_OUT, L2, WF_EMB)
    for c in range(C_OUT):
        for j in range(L2):
            w2[c * L + 2 * j, :WF_EMB] = wfw[c, j, :]
    # rows [128, 128+N_SEL): feats MLP weight -> output cols [WF_EMB, WF_EMB+FEAT_EMB)
    w2[LANE:LANE + N_SEL, WF_EMB:WF_EMB + FEAT_EMB] = np.asarray(raw["feat_w"])
    # bias row = the feats ones-carry lane; also emits the next ones-carry.
    w2[LANE + ONES_LANE_FT, :WF_EMB] = np.asarray(raw["wf_lin_b"])
    w2[LANE + ONES_LANE_FT, WF_EMB:WF_EMB + FEAT_EMB] = np.asarray(raw["feat_b"])
    w2[LANE + ONES_LANE_FT, ONES_LANE_ENC] = 1.0

    # ---- block 3: classifier MLP (concat folded) + bias row + ones-carry ------
    w3 = blob[W_CLS_OFF:W_CLS_OFF + LANE]
    w3[:WF_EMB + FEAT_EMB, :CLS_HID] = np.asarray(raw["cls_w"])
    w3[ONES_LANE_ENC, :CLS_HID] = np.asarray(raw["cls_b"])
    w3[ONES_LANE_ENC, ONES_LANE_H] = 1.0

    # ---- block 4: merged per-level heads + bias row ----------------------------
    w4 = blob[W_HEAD_OFF:W_HEAD_OFF + LANE]
    head_w = np.concatenate(
        [np.asarray(raw["heads"][lvl][0]) for lvl in LABEL_SCHEMA], axis=1)
    head_b = np.concatenate(
        [np.asarray(raw["heads"][lvl][1]) for lvl in LABEL_SCHEMA])
    w4[:CLS_HID, :N_CLASSES_TOTAL] = head_w
    w4[ONES_LANE_H, :N_CLASSES_TOTAL] = head_b

    return {"wblob": jnp.asarray(blob)}


# ------------------------------ pure-JAX reference -----------------------------
def forward_ref(raw, waveform, feats):
    """Reference with the original PyTorch-module semantics (for correctness)."""
    xp = jnp.pad(waveform, ((0, 0), (0, 0), (PAD, PAD)))
    conv = jnp.zeros((waveform.shape[0], C_OUT, L), jnp.float32)
    for k in range(KSIZE):
        conv = conv + jnp.einsum("oc,bcl->bol", raw["conv_w"][:, :, k],
                                 xp[:, :, k:k + L])
    conv = jax.nn.relu(conv + raw["conv_b"][None, :, None])
    pooled = jnp.max(conv.reshape(conv.shape[0], C_OUT, L2, POOL), axis=-1)
    h = pooled.reshape(pooled.shape[0], -1)
    enc_wf = jax.nn.relu(h @ raw["wf_lin_w"] + raw["wf_lin_b"])
    sel = feats[:, jnp.array(FEATS_IDX)]
    enc_ft = jax.nn.relu(sel @ raw["feat_w"] + raw["feat_b"])
    x = jnp.concatenate([enc_wf, enc_ft], axis=1)
    x = jax.nn.relu(x @ raw["cls_w"] + raw["cls_b"])
    return {lvl: x @ w + b for lvl, (w, b) in raw["heads"].items()}


# ----------------------------------- main --------------------------------------
if __name__ == "__main__":
    key = jax.random.PRNGKey(0)
    k_p, k_w, k_f = jax.random.split(key, 3)
    raw = init_raw_params(k_p)
    kparams = prep_params(raw)

    waveform = jax.random.normal(k_w, (B, C_IN, L), jnp.float32)   # x['waveform'], NCW
    feats = jax.random.normal(k_f, (B, N_FEATS), jnp.float32)      # x['feats']

    fwd = jax.jit(forward)
    out = jax.block_until_ready(fwd(kparams, waveform, feats))

    ref = forward_ref(raw, waveform, feats)
    for lvl, n in LABEL_SCHEMA.items():
        assert out[lvl].shape == (B, n)
        assert jnp.allclose(out[lvl], ref[lvl], rtol=1e-4, atol=1e-4), lvl

    print("KERNEL_OK")
</pallas_src>

<mosaic_0001>
module attributes {stable_mosaic.version = 11 : i64} {
  func.func @_fused_forward_kernel(%arg0: memref<8x128xf32, #tpu.memory_space<vmem>>, %arg1: memref<8x128xf32, #tpu.memory_space<vmem>>, %arg2: memref<640x128xf32, #tpu.memory_space<vmem>>, %arg3: memref<8x128xf32, #tpu.memory_space<vmem>>) attributes {dimension_semantics = [], scalar_prefetch = 0 : i64, scratch_operands = 0 : i64, tpu.core_type = #tpu.core_type<tc>} {
    %c0 = arith.constant 0 : index
    %c0_0 = arith.constant 0 : index
    %0 = vector.load %arg2[%c0, %c0_0] : memref<640x128xf32, #tpu.memory_space<vmem>>, vector<128x128xf32>
    %c128 = arith.constant 128 : index
    %c0_1 = arith.constant 0 : index
    %1 = vector.load %arg2[%c128, %c0_1] : memref<640x128xf32, #tpu.memory_space<vmem>>, vector<256x128xf32>
    %c384 = arith.constant 384 : index
    %c0_2 = arith.constant 0 : index
    %2 = vector.load %arg2[%c384, %c0_2] : memref<640x128xf32, #tpu.memory_space<vmem>>, vector<128x128xf32>
    %c512 = arith.constant 512 : index
    %c0_3 = arith.constant 0 : index
    %3 = vector.load %arg2[%c512, %c0_3] : memref<640x128xf32, #tpu.memory_space<vmem>>, vector<128x128xf32>
    %c0_4 = arith.constant 0 : index
    %c0_5 = arith.constant 0 : index
    %4 = vector.load %arg0[%c0_4, %c0_5] : memref<8x128xf32, #tpu.memory_space<vmem>>, vector<8x128xf32>
    %cst = arith.constant dense<0.000000e+00> : vector<8x128xf32>
    %5 = tpu.matmul %4, %0, %cst {dimension_numbers = #tpu.dot_dimension_numbers<[1], [0], [0], [1], [0, 0, 1, 1], [], []>} : vector<8x128xf32>, vector<128x128xf32>, vector<8x128xf32> -> vector<8x128xf32>
    %cst_6 = arith.constant 0.000000e+00 : f32
    %6 = vector.broadcast %cst_6 : f32 to vector<8x128xf32>
    %7 = arith.maximumf %5, %6 : vector<8x128xf32>
    %c127_i32 = arith.constant 127 : i32
    %8 = tpu.dynamic_rotate %7 by %c127_i32 dim 1 : vector<8x128xf32>, i32 -> vector<8x128xf32>
    %9 = arith.maximumf %7, %8 : vector<8x128xf32>
    %c0_7 = arith.constant 0 : index
    %c0_8 = arith.constant 0 : index
    %10 = vector.load %arg1[%c0_7, %c0_8] : memref<8x128xf32, #tpu.memory_space<vmem>>, vector<8x128xf32>
    %11 = tpu.concatenate %9, %10 in 1 : vector<8x128xf32>, vector<8x128xf32> -> vector<8x256xf32>
    %cst_9 = arith.constant dense<0.000000e+00> : vector<8x128xf32>
    %12 = tpu.matmul %11, %1, %cst_9 {dimension_numbers = #tpu.dot_dimension_numbers<[1], [0], [0], [1], [0, 0, 1, 1], [], []>} : vector<8x256xf32>, vector<256x128xf32>, vector<8x128xf32> -> vector<8x128xf32>
    %cst_10 = arith.constant 0.000000e+00 : f32
    %13 = vector.broadcast %cst_10 : f32 to vector<8x128xf32>
    %14 = arith.maximumf %12, %13 : vector<8x128xf32>
    %cst_11 = arith.constant dense<0.000000e+00> : vector<8x128xf32>
    %15 = tpu.matmul %14, %2, %cst_11 {dimension_numbers = #tpu.dot_dimension_numbers<[1], [0], [0], [1], [0, 0, 1, 1], [], []>} : vector<8x128xf32>, vector<128x128xf32>, vector<8x128xf32> -> vector<8x128xf32>
    %cst_12 = arith.constant 0.000000e+00 : f32
    %16 = vector.broadcast %cst_12 : f32 to vector<8x128xf32>
    %17 = arith.maximumf %15, %16 : vector<8x128xf32>
    %cst_13 = arith.constant dense<0.000000e+00> : vector<8x128xf32>
    %18 = tpu.matmul %17, %3, %cst_13 {dimension_numbers = #tpu.dot_dimension_numbers<[1], [0], [0], [1], [0, 0, 1, 1], [], []>} : vector<8x128xf32>, vector<128x128xf32>, vector<8x128xf32> -> vector<8x128xf32>
    %c0_14 = arith.constant 0 : index
    %c0_15 = arith.constant 0 : index
    %19 = vector.load %arg3[%c0_14, %c0_15] : memref<8x128xf32, #tpu.memory_space<vmem>>, vector<8x128xf32>
    tpu.vector_store %arg3[%c0_14, %c0_15], %18 {strides = array<i32>} : memref<8x128xf32, #tpu.memory_space<vmem>>, vector<8x128xf32>,
    return
  }
}

</mosaic_0001>

<llo_original>
// kernel: forward.1
$region0: #{forward.1}
  #allocation0 [shape = 'u32[]', space=smem, size = 0x4, offset = 0x4, fixed_abs, tag = 'smem constant byte address 0x4 - core index']
  #allocation1 [shape = 'u32[144,128]{1,0:T(1,128)}', space=vmem, size = 0x12000, scoped, tag = 'internal scratch']
  %s0 = inlined_call_operand.vmem [shape: f32[8,128], index: 0, kind: input, shape index: {}]
  %s1 = inlined_call_operand.vmem [shape: f32[8,128], index: 1, kind: input, shape index: {}]
  %s2 = inlined_call_operand.hbm [shape: f32[640,128], index: 2, kind: input, shape index: {}]
  %s3 = inlined_call_operand.vmem [shape: f32[8,128], index: 3, kind: output, shape index: {}]
  %s4 = sld [smem:[#allocation0]]
  $region26: #{forward.1} parent=0
    _
  %s6 = ssub.s32 1, %s4
  %s7 = scalar_select 0, %s6, %s4
  $region1: #{forward.1} parent=0
    #allocation2 [shape = 'u8[327680]{0}', space=vmem, size = 0x50000, scoped, tag = 'input window, operand 2, single buffered']
    #allocation3 [shape = 's32[1]{0}', space=sflag, size = 0x4, scoped, tag = 'scoped memory for forward.1']
    %8 = vsyncpa [#allocation3], 0
    // Predicated region
    $region2: #{forward.1} parent=1 // pred_check
      _
    $region3: #{forward.1} parent=1 // pred_check_branch
      %10 = sbr.rel (0) target = $region5
    $region4: #{forward.1} parent=1 // pred_region
      _
    $region5: #{forward.1} parent=1 // pred_fallthru
      _
    // Predicated region
    $region6: #{forward.1} parent=1 // pred_check
      _
    $region7: #{forward.1} parent=1 // pred_check_branch
      %12 = sbr.rel (0) target = $region9
    $region8: #{forward.1} parent=1 // pred_region
      _
    $region9: #{forward.1} parent=1 // pred_fallthru
      _
    // Predicated region
    $region10: #{forward.1} parent=1 // pred_check
      _
    $region11: #{forward.1} parent=1 // pred_check_branch
      %14 = sbr.rel (0) target = $region13
    $region12: #{forward.1} parent=1 // pred_region
      %s16 = ssub.s32 10240, 10240
      %17 = vsyncadd [#allocation3], %s16
      %s18 = sshll.u32 [#allocation2], 4
      %s19 = int_to_ptr.vmem [resolvable:$true] %s18
      %24 = dma.hbm_to_vmem [thread:$0]  %s2, 10240, %s19, [#allocation3], 128, 128, 8
    $region13: #{forward.1} parent=1 // pred_fallthru
      _
    // Predicated region
    $region14: #{forward.1} parent=1 // pred_check
      _
    $region15: #{forward.1} parent=1 // pred_check_branch
      %26 = sbr.rel (0) target = $region17
    $region16: #{forward.1} parent=1 // pred_region
      %27 = dma.done [#allocation3], 10240
    $region17: #{forward.1} parent=1 // pred_fallthru
      _
    %v28 = vld [vmem:[#allocation2] sm:$0xff]
    %v29 = vld [vmem:[#allocation2 + $0x8] sm:$0xff]
    %v30 = vld [vmem:[#allocation2 + $0x10] sm:$0xff]
    %v31 = vld [vmem:[#allocation2 + $0x18] sm:$0xff]
    %v32 = vld [vmem:[#allocation2 + $0x20] sm:$0xff]
    %v33 = vld [vmem:[#allocation2 + $0x28] sm:$0xff]
    %v34 = vld [vmem:[#allocation2 + $0x30] sm:$0xff]
    %v35 = vld [vmem:[#allocation2 + $0x38] sm:$0xff]
    %v36 = vld [vmem:[#allocation2 + $0x40] sm:$0xff]
    %v37 = vld [vmem:[#allocation2 + $0x48] sm:$0xff]
    %v38 = vld [vmem:[#allocation2 + $0x50] sm:$0xff]
    %v39 = vld [vmem:[#allocation2 + $0x58] sm:$0xff]
    %v40 = vld [vmem:[#allocation2 + $0x60] sm:$0xff]
    %v41 = vld [vmem:[#allocation2 + $0x68] sm:$0xff]
    %v42 = vld [vmem:[#allocation2 + $0x70] sm:$0xff]
    %v43 = vld [vmem:[#allocation2 + $0x78] sm:$0xff]
    %v44 = vld [vmem:[#allocation2 + $0x80] sm:$0xff]
    %v45 = vld [vmem:[#allocation2 + $0x88] sm:$0xff]
    %v46 = vld [vmem:[#allocation2 + $0x90] sm:$0xff]
    %v47 = vld [vmem:[#allocation2 + $0x98] sm:$0xff]
    %v48 = vld [vmem:[#allocation2 + $0xa0] sm:$0xff]
    %v49 = vld [vmem:[#allocation2 + $0xa8] sm:$0xff]
    %v50 = vld [vmem:[#allocation2 + $0xb0] sm:$0xff]
    %v51 = vld [vmem:[#allocation2 + $0xb8] sm:$0xff]
    %v52 = vld [vmem:[#allocation2 + $0xc0] sm:$0xff]
    %v53 = vld [vmem:[#allocation2 + $0xc8] sm:$0xff]
    %v54 = vld [vmem:[#allocation2 + $0xd0] sm:$0xff]
    %v55 = vld [vmem:[#allocation2 + $0xd8] sm:$0xff]
    %v56 = vld [vmem:[#allocation2 + $0xe0] sm:$0xff]
    %v57 = vld [vmem:[#allocation2 + $0xe8] sm:$0xff]
    %v58 = vld [vmem:[#allocation2 + $0xf0] sm:$0xff]
    %v59 = vld [vmem:[#allocation2 + $0xf8] sm:$0xff]
    %v60 = vld [vmem:[#allocation2 + $0x100] sm:$0xff]
    %v61 = vld [vmem:[#allocation2 + $0x108] sm:$0xff]
    %v62 = vld [vmem:[#allocation2 + $0x110] sm:$0xff]
    %v63 = vld [vmem:[#allocation2 + $0x118] sm:$0xff]
    %v64 = vld [vmem:[#allocation2 + $0x120] sm:$0xff]
    %v65 = vld [vmem:[#allocation2 + $0x128] sm:$0xff]
    %v66 = vld [vmem:[#allocation2 + $0x130] sm:$0xff]
    %v67 = vld [vmem:[#allocation2 + $0x138] sm:$0xff]
    %v68 = vld [vmem:[#allocation2 + $0x140] sm:$0xff]
    %v69 = vld [vmem:[#allocation2 + $0x148] sm:$0xff]
    %v70 = vld [vmem:[#allocation2 + $0x150] sm:$0xff]
    %v71 = vld [vmem:[#allocation2 + $0x158] sm:$0xff]
    %v72 = vld [vmem:[#allocation2 + $0x160] sm:$0xff]
    %v73 = vld [vmem:[#allocation2 + $0x168] sm:$0xff]
    %v74 = vld [vmem:[#allocation2 + $0x170] sm:$0xff]
    %v75 = vld [vmem:[#allocation2 + $0x178] sm:$0xff]
    %v76 = vld [vmem:[#allocation2 + $0x180] sm:$0xff]
    %v77 = vld [vmem:[#allocation2 + $0x188] sm:$0xff]
    %v78 = vld [vmem:[#allocation2 + $0x190] sm:$0xff]
    %v79 = vld [vmem:[#allocation2 + $0x198] sm:$0xff]
    %v80 = vld [vmem:[#allocation2 + $0x1a0] sm:$0xff]
    %v81 = vld [vmem:[#allocation2 + $0x1a8] sm:$0xff]
    %v82 = vld [vmem:[#allocation2 + $0x1b0] sm:$0xff]
    %v83 = vld [vmem:[#allocation2 + $0x1b8] sm:$0xff]
    %v84 = vld [vmem:[#allocation2 + $0x1c0] sm:$0xff]
    %v85 = vld [vmem:[#allocation2 + $0x1c8] sm:$0xff]
    %v86 = vld [vmem:[#allocation2 + $0x1d0] sm:$0xff]
    %v87 = vld [vmem:[#allocation2 + $0x1d8] sm:$0xff]
    %v88 = vld [vmem:[#allocation2 + $0x1e0] sm:$0xff]
    %v89 = vld [vmem:[#allocation2 + $0x1e8] sm:$0xff]
    %v90 = vld [vmem:[#allocation2 + $0x1f0] sm:$0xff]
    %v91 = vld [vmem:[#allocation2 + $0x1f8] sm:$0xff]
    %v92 = vld [vmem:[#allocation2 + $0x200] sm:$0xff]
    %v93 = vld [vmem:[#allocation2 + $0x208] sm:$0xff]
    %v94 = vld [vmem:[#allocation2 + $0x210] sm:$0xff]
    %v95 = vld [vmem:[#allocation2 + $0x218] sm:$0xff]
    %v96 = vld [vmem:[#allocation2 + $0x220] sm:$0xff]
    %v97 = vld [vmem:[#allocation2 + $0x228] sm:$0xff]
    %v98 = vld [vmem:[#allocation2 + $0x230] sm:$0xff]
    %v99 = vld [vmem:[#allocation2 + $0x238] sm:$0xff]
    %v100 = vld [vmem:[#allocation2 + $0x240] sm:$0xff]
    %v101 = vld [vmem:[#allocation2 + $0x248] sm:$0xff]
    %v102 = vld [vmem:[#allocation2 + $0x250] sm:$0xff]
    %v103 = vld [vmem:[#allocation2 + $0x258] sm:$0xff]
    %v104 = vld [vmem:[#allocation2 + $0x260] sm:$0xff]
    %v105 = vld [vmem:[#allocation2 + $0x268] sm:$0xff]
    %v106 = vld [vmem:[#allocation2 + $0x270] sm:$0xff]
    %v107 = vld [vmem:[#allocation2 + $0x278] sm:$0xff]
    %v108 = vld [vmem:[%s0] sm:$0xff]
    %109 = vmatprep.subr.mxu0 0.0
    %110 = vmatpush1.msra.mxu0 %v43
    %111 = vmatprep.subr.mxu0 0.0
    %112 = vmatpush1.msra.mxu0 %v42
    %113 = vmatprep.subr.mxu0 0.0
    %114 = vmatpush1.msra.mxu0 %v41
    %115 = vmatprep.subr.mxu0 0.0
    %116 = vmatpush1.msra.mxu0 %v40
    %117 = vmatprep.subr.mxu0 0.0
    %118 = vmatpush1.msra.mxu0 %v39
    %119 = vmatprep.subr.mxu0 0.0
    %120 = vmatpush1.msra.mxu0 %v38
    %121 = vmatprep.subr.mxu0 0.0
    %122 = vmatpush1.msra.mxu0 %v37
    %123 = vmatprep.subr.mxu0 0.0
    %124 = vmatpush1.msra.mxu0 %v36
    %125 = vmatprep.subr.mxu0 0.0
    %126 = vmatpush1.msra.mxu0 %v35
    %127 = vmatprep.subr.mxu0 0.0
    %128 = vmatpush1.msra.mxu0 %v34
    %129 = vmatprep.subr.mxu0 0.0
    %130 = vmatpush1.msra.mxu0 %v33
    %131 = vmatprep.subr.mxu0 0.0
    %132 = vmatpush1.msra.mxu0 %v32
    %133 = vmatprep.subr.mxu0 0.0
    %134 = vmatpush1.msra.mxu0 %v31
    %135 = vmatprep.subr.mxu0 0.0
    %136 = vmatpush1.msra.mxu0 %v30
    %137 = vmatprep.subr.mxu0 0.0
    %138 = vmatpush1.msra.mxu0 %v29
    %139 = vmatprep.subr.mxu0 0.0
    %140 = vmatpush1.msra.mxu0 %v28
    %141 = vmatprep.subr.mxu0 0.0
    %142 = vmatpush2.msra.mxu0 0.0
    %143 = vmatprep.subr.mxu0 0.0
    %144 = vmatpush2.msra.mxu0 0.0
    %145 = vmatprep.subr.mxu0 0.0
    %146 = vmatpush2.msra.mxu0 0.0
    %147 = vmatprep.subr.mxu0 0.0
    %148 = vmatpush2.msra.mxu0 0.0
    %149 = vmatprep.subr.mxu0 0.0
    %150 = vmatpush2.msra.mxu0 0.0
    %151 = vmatprep.subr.mxu0 0.0
    %152 = vmatpush2.msra.mxu0 0.0
    %153 = vmatprep.subr.mxu0 0.0
    %154 = vmatpush2.msra.mxu0 0.0
    %155 = vmatprep.subr.mxu0 0.0
    %156 = vmatpush2.msra.mxu0 0.0
    %157 = vmatprep.subr.mxu0 0.0
    %158 = vmatpush2.msra.mxu0 0.0
    %159 = vmatprep.subr.mxu0 0.0
    %160 = vmatpush2.msra.mxu0 0.0
    %161 = vmatprep.subr.mxu0 0.0
    %162 = vmatpush2.msra.mxu0 0.0
    %163 = vmatprep.subr.mxu0 0.0
    %164 = vmatpush2.msra.mxu0 0.0
    %165 = vmatprep.subr.mxu0 0.0
    %166 = vmatpush2.msra.mxu0 0.0
    %167 = vmatprep.subr.mxu0 0.0
    %168 = vmatpush2.msra.mxu0 0.0
    %169 = vmatprep.subr.mxu0 0.0
    %170 = vmatpush2.msra.mxu0 0.0
    %171 = vmatprep.subr.mxu0 0.0
    %172 = vmatpush2.msra.mxu0 0.0
    %173 = vmatprep.mubr.f32.mxu0 0.0
    %174 = vmatmul.mubr.f32.gmra.mxu0 %v108
    %v175 = vpop.f32.mrf.mxu0
    %v176 = vadd.f32 0.0, %v175
    %v177 = vpop.f32.mrf.mxu0
    %178 = vdwg.mxu0
    %v179 = vmax.f32 %v176, 0.0
    %180 = vrot.lane.b32.xlu0 %v179, 127
    %v181 = vpop.permute.xlu0 %180
    %v182 = vmax.f32 %v179, %v181
    %v183 = vld [vmem:[%s1] sm:$0xff]
    %184 = vmatprep.subr.mxu0 0.0
    %185 = vmatpush1.msra.mxu0 %v59
    %186 = vmatprep.subr.mxu0 0.0
    %187 = vmatpush1.msra.mxu0 %v58
    %188 = vmatprep.subr.mxu0 0.0
    %189 = vmatpush1.msra.mxu0 %v57
    %190 = vmatprep.subr.mxu0 0.0
    %191 = vmatpush1.msra.mxu0 %v56
    %192 = vmatprep.subr.mxu0 0.0
    %193 = vmatpush1.msra.mxu0 %v55
    %194 = vmatprep.subr.mxu0 0.0
    %195 = vmatpush1.msra.mxu0 %v54
    %196 = vmatprep.subr.mxu0 0.0
    %197 = vmatpush1.msra.mxu0 %v53
    %198 = vmatprep.subr.mxu0 0.0
    %199 = vmatpush1.msra.mxu0 %v52
    %200 = vmatprep.subr.mxu0 0.0
    %201 = vmatpush1.msra.mxu0 %v51
    %202 = vmatprep.subr.mxu0 0.0
    %203 = vmatpush1.msra.mxu0 %v50
    %204 = vmatprep.subr.mxu0 0.0
    %205 = vmatpush1.msra.mxu0 %v49
    %206 = vmatprep.subr.mxu0 0.0
    %207 = vmatpush1.msra.mxu0 %v48
    %208 = vmatprep.subr.mxu0 0.0
    %209 = vmatpush1.msra.mxu0 %v47
    %210 = vmatprep.subr.mxu0 0.0
    %211 = vmatpush1.msra.mxu0 %v46
    %212 = vmatprep.subr.mxu0 0.0
    %213 = vmatpush1.msra.mxu0 %v45
    %214 = vmatprep.subr.mxu0 0.0
    %215 = vmatpush1.msra.mxu0 %v44
    %216 = vmatprep.subr.mxu0 0.0
    %217 = vmatpush2.msra.mxu0 %v75
    %218 = vmatprep.subr.mxu0 0.0
    %219 = vmatpush2.msra.mxu0 %v74
    %220 = vmatprep.subr.mxu0 0.0
    %221 = vmatpush2.msra.mxu0 %v73
    %222 = vmatprep.subr.mxu0 0.0
    %223 = vmatpush2.msra.mxu0 %v72
    %224 = vmatprep.subr.mxu0 0.0
    %225 = vmatpush2.msra.mxu0 %v71
    %226 = vmatprep.subr.mxu0 0.0
    %227 = vmatpush2.msra.mxu0 %v70
    %228 = vmatprep.subr.mxu0 0.0
    %229 = vmatpush2.msra.mxu0 %v69
    %230 = vmatprep.subr.mxu0 0.0
    %231 = vmatpush2.msra.mxu0 %v68
    %232 = vmatprep.subr.mxu0 0.0
    %233 = vmatpush2.msra.mxu0 %v67
    %234 = vmatprep.subr.mxu0 0.0
    %235 = vmatpush2.msra.mxu0 %v66
    %236 = vmatprep.subr.mxu0 0.0
    %237 = vmatpush2.msra.mxu0 %v65
    %238 = vmatprep.subr.mxu0 0.0
    %239 = vmatpush2.msra.mxu0 %v64
    %240 = vmatprep.subr.mxu0 0.0
    %241 = vmatpush2.msra.mxu0 %v63
    %242 = vmatprep.subr.mxu0 0.0
    %243 = vmatpush2.msra.mxu0 %v62
    %244 = vmatprep.subr.mxu0 0.0
    %245 = vmatpush2.msra.mxu0 %v61
    %246 = vmatprep.subr.mxu0 0.0
    %247 = vmatpush2.msra.mxu0 %v60
    %248 = vmatprep.mubr.f32.mxu0 %v183
    %249 = vmatmul.mubr.f32.gmra.mxu0 %v182
    %v250 = vpop.f32.mrf.mxu0
    %v251 = vadd.f32 0.0, %v250
    %v252 = vpop.f32.mrf.mxu0
    %253 = vdwg.mxu0
    %v254 = vmax.f32 %v251, 0.0
    %255 = vmatprep.subr.mxu0 0.0
    %256 = vmatpush1.msra.mxu0 %v91
    %257 = vmatprep.subr.mxu0 0.0
    %258 = vmatpush1.msra.mxu0 %v90
    %259 = vmatprep.subr.mxu0 0.0
    %260 = vmatpush1.msra.mxu0 %v89
    %261 = vmatprep.subr.mxu0 0.0
    %262 = vmatpush1.msra.mxu0 %v88
    %263 = vmatprep.subr.mxu0 0.0
    %264 = vmatpush1.msra.mxu0 %v87
    %265 = vmatprep.subr.mxu0 0.0
    %266 = vmatpush1.msra.mxu0 %v86
    %267 = vmatprep.subr.mxu0 0.0
    %268 = vmatpush1.msra.mxu0 %v85
    %269 = vmatprep.subr.mxu0 0.0
    %270 = vmatpush1.msra.mxu0 %v84
    %271 = vmatprep.subr.mxu0 0.0
    %272 = vmatpush1.msra.mxu0 %v83
    %273 = vmatprep.subr.mxu0 0.0
    %274 = vmatpush1.msra.mxu0 %v82
    %275 = vmatprep.subr.mxu0 0.0
    %276 = vmatpush1.msra.mxu0 %v81
    %277 = vmatprep.subr.mxu0 0.0
    %278 = vmatpush1.msra.mxu0 %v80
    %279 = vmatprep.subr.mxu0 0.0
    %280 = vmatpush1.msra.mxu0 %v79
    %281 = vmatprep.subr.mxu0 0.0
    %282 = vmatpush1.msra.mxu0 %v78
    %283 = vmatprep.subr.mxu0 0.0
    %284 = vmatpush1.msra.mxu0 %v77
    %285 = vmatprep.subr.mxu0 0.0
    %286 = vmatpush1.msra.mxu0 %v76
    %287 = vmatprep.subr.mxu0 0.0
    %288 = vmatpush2.msra.mxu0 0.0
    %289 = vmatprep.subr.mxu0 0.0
    %290 = vmatpush2.msra.mxu0 0.0
    %291 = vmatprep.subr.mxu0 0.0
    %292 = vmatpush2.msra.mxu0 0.0
    %293 = vmatprep.subr.mxu0 0.0
    %294 = vmatpush2.msra.mxu0 0.0
    %295 = vmatprep.subr.mxu0 0.0
    %296 = vmatpush2.msra.mxu0 0.0
    %297 = vmatprep.subr.mxu0 0.0
    %298 = vmatpush2.msra.mxu0 0.0
    %299 = vmatprep.subr.mxu0 0.0
    %300 = vmatpush2.msra.mxu0 0.0
    %301 = vmatprep.subr.mxu0 0.0
    %302 = vmatpush2.msra.mxu0 0.0
    %303 = vmatprep.subr.mxu0 0.0
    %304 = vmatpush2.msra.mxu0 0.0
    %305 = vmatprep.subr.mxu0 0.0
    %306 = vmatpush2.msra.mxu0 0.0
    %307 = vmatprep.subr.mxu0 0.0
    %308 = vmatpush2.msra.mxu0 0.0
    %309 = vmatprep.subr.mxu0 0.0
    %310 = vmatpush2.msra.mxu0 0.0
    %311 = vmatprep.subr.mxu0 0.0
    %312 = vmatpush2.msra.mxu0 0.0
    %313 = vmatprep.subr.mxu0 0.0
    %314 = vmatpush2.msra.mxu0 0.0
    %315 = vmatprep.subr.mxu0 0.0
    %316 = vmatpush2.msra.mxu0 0.0
    %317 = vmatprep.subr.mxu0 0.0
    %318 = vmatpush2.msra.mxu0 0.0
    %319 = vmatprep.mubr.f32.mxu0 0.0
    %320 = vmatmul.mubr.f32.gmra.mxu0 %v254
    %v321 = vpop.f32.mrf.mxu0
    %v322 = vadd.f32 0.0, %v321
    %v323 = vpop.f32.mrf.mxu0
    %324 = vdwg.mxu0
    %v325 = vmax.f32 %v322, 0.0
    %326 = vmatprep.subr.mxu0 0.0
    %327 = vmatpush1.msra.mxu0 %v107
    %328 = vmatprep.subr.mxu0 0.0
    %329 = vmatpush1.msra.mxu0 %v106
    %330 = vmatprep.subr.mxu0 0.0
    %331 = vmatpush1.msra.mxu0 %v105
    %332 = vmatprep.subr.mxu0 0.0
    %333 = vmatpush1.msra.mxu0 %v104
    %334 = vmatprep.subr.mxu0 0.0
    %335 = vmatpush1.msra.mxu0 %v103
    %336 = vmatprep.subr.mxu0 0.0
    %337 = vmatpush1.msra.mxu0 %v102
    %338 = vmatprep.subr.mxu0 0.0
    %339 = vmatpush1.msra.mxu0 %v101
    %340 = vmatprep.subr.mxu0 0.0
    %341 = vmatpush1.msra.mxu0 %v100
    %342 = vmatprep.subr.mxu0 0.0
    %343 = vmatpush1.msra.mxu0 %v99
    %344 = vmatprep.subr.mxu0 0.0
    %345 = vmatpush1.msra.mxu0 %v98
    %346 = vmatprep.subr.mxu0 0.0
    %347 = vmatpush1.msra.mxu0 %v97
    %348 = vmatprep.subr.mxu0 0.0
    %349 = vmatpush1.msra.mxu0 %v96
    %350 = vmatprep.subr.mxu0 0.0
    %351 = vmatpush1.msra.mxu0 %v95
    %352 = vmatprep.subr.mxu0 0.0
    %353 = vmatpush1.msra.mxu0 %v94
    %354 = vmatprep.subr.mxu0 0.0
    %355 = vmatpush1.msra.mxu0 %v93
    %356 = vmatprep.subr.mxu0 0.0
    %357 = vmatpush1.msra.mxu0 %v92
    %358 = vmatprep.subr.mxu0 0.0
    %359 = vmatpush2.msra.mxu0 0.0
    %360 = vmatprep.subr.mxu0 0.0
    %361 = vmatpush2.msra.mxu0 0.0
    %362 = vmatprep.subr.mxu0 0.0
    %363 = vmatpush2.msra.mxu0 0.0
    %364 = vmatprep.subr.mxu0 0.0
    %365 = vmatpush2.msra.mxu0 0.0
    %366 = vmatprep.subr.mxu0 0.0
    %367 = vmatpush2.msra.mxu0 0.0
    %368 = vmatprep.subr.mxu0 0.0
    %369 = vmatpush2.msra.mxu0 0.0
    %370 = vmatprep.subr.mxu0 0.0
    %371 = vmatpush2.msra.mxu0 0.0
    %372 = vmatprep.subr.mxu0 0.0
    %373 = vmatpush2.msra.mxu0 0.0
    %374 = vmatprep.subr.mxu0 0.0
    %375 = vmatpush2.msra.mxu0 0.0
    %376 = vmatprep.subr.mxu0 0.0
    %377 = vmatpush2.msra.mxu0 0.0
    %378 = vmatprep.subr.mxu0 0.0
    %379 = vmatpush2.msra.mxu0 0.0
    %380 = vmatprep.subr.mxu0 0.0
    %381 = vmatpush2.msra.mxu0 0.0
    %382 = vmatprep.subr.mxu0 0.0
    %383 = vmatpush2.msra.mxu0 0.0
    %384 = vmatprep.subr.mxu0 0.0
    %385 = vmatpush2.msra.mxu0 0.0
    %386 = vmatprep.subr.mxu0 0.0
    %387 = vmatpush2.msra.mxu0 0.0
    %388 = vmatprep.subr.mxu0 0.0
    %389 = vmatpush2.msra.mxu0 0.0
    %390 = vmatprep.mubr.f32.mxu0 0.0
    %391 = vmatmul.mubr.f32.gmra.mxu0 %v325
    %v392 = vpop.f32.mrf.mxu0
    %v393 = vadd.f32 0.0, %v392
    %v394 = vpop.f32.mrf.mxu0
    %395 = vdwg.mxu0
    %396 = vst [vmem:[%s3] sm:$0xff] %v393
    // Predicated region
    $region18: #{forward.1} parent=1 // pred_check
      _
    $region19: #{forward.1} parent=1 // pred_check_branch
      %398 = sbr.rel (0) target = $region21
    $region20: #{forward.1} parent=1 // pred_region
      _
    $region21: #{forward.1} parent=1 // pred_fallthru
      _
    // Predicated region
    $region22: #{forward.1} parent=1 // pred_check
      _
    $region23: #{forward.1} parent=1 // pred_check_branch
      %400 = sbr.rel (0) target = $region25
    $region24: #{forward.1} parent=1 // pred_region
      _
    $region25: #{forward.1} parent=1 // pred_fallthru
      _
    %401 = vsyncpa [#allocation3], 1

</llo_original>
